<compile_context>
chip_gen: v7x
topology: tpu7x:2x2x1
jax: 0.10.0
libtpu: 0.0.40
codegen_flags: <defaults>
</compile_context>

<pallas_src>
import math

import jax
import jax.numpy as jnp
from jax.experimental import pallas as pl
from jax.experimental.pallas import tpu as pltpu

IN_FEATURES = 2048
OUT_FEATURES = 23
DEFAULT_TM = 1024                       # row-tile size
DEFAULT_COMPUTE_DTYPE = jnp.bfloat16    # MXU operand dtype (accumulation stays f32)


def _round_up(x, m):
    return ((x + m - 1) // m) * m


def _linear_kernel(x_ref, w_ref, b_ref, o_ref):
    # x_ref: (TM, 2048)   w_ref: (2048, 23) resident   b_ref: (1, 23)   o_ref: (TM, 23)
    x = x_ref[...].astype(w_ref.dtype)          # native single-pass bf16 MXU path
    acc = jnp.dot(x, w_ref[...], preferred_element_type=jnp.float32)
    o_ref[...] = (acc + b_ref[...]).astype(o_ref.dtype)


def prepare_params(weight, bias, compute_dtype=DEFAULT_COMPUTE_DTYPE):
    """One-time parameter prep (hoisted off the forward path).

    Args:
      weight: (23, 2048) float32 (PyTorch nn.Linear layout)
      bias:   (23,)      float32
    Returns:
      w_t: (2048, 23) in compute_dtype (VMEM-resident MXU operand)
      b:   (1, 23)    float32 (added post-accumulation)
    """
    w_t = weight.T.astype(compute_dtype)
    b = bias.astype(jnp.float32).reshape(1, OUT_FEATURES)
    return w_t, b


def deepheme_transformer_forward(x, w_t, b, tm=DEFAULT_TM):
    """Pallas implementation of DeepHemeTransformer.forward.

    Args:
      x:   (N, 2048) float32 or bfloat16
      w_t: (2048, 23) from prepare_params
      b:   (1, 23)    from prepare_params
    Returns:
      (N, 23) float32
    """
    n, k = x.shape
    assert k == IN_FEATURES

    # Row tile: multiple of 8 (sublane), capped at `tm`.  No input padding —
    # Pallas masks the partial edge block.
    tm_eff = min(tm, _round_up(n, 8))
    grid = (pl.cdiv(n, tm_eff),)

    # Scoped-VMEM budget: double-buffered x tiles + resident weight/bias +
    # double-buffered (tm, 23) output tiles + compiler slack.
    vmem_limit = (2 * tm_eff * IN_FEATURES * x.dtype.itemsize
                  + 2 * IN_FEATURES * OUT_FEATURES * w_t.dtype.itemsize
                  + 2 * tm_eff * OUT_FEATURES * 4
                  + (4 << 20))
    vmem_limit = int(min(max(vmem_limit, 16 << 20), 60 << 20))  # <= v7x physical

    cost = pl.CostEstimate(
        flops=2 * n * IN_FEATURES * OUT_FEATURES,
        bytes_accessed=(n * IN_FEATURES * x.dtype.itemsize
                        + IN_FEATURES * OUT_FEATURES * w_t.dtype.itemsize
                        + n * OUT_FEATURES * 4),
        transcendentals=0,
    )

    return pl.pallas_call(
        _linear_kernel,
        out_shape=jax.ShapeDtypeStruct((n, OUT_FEATURES), jnp.float32),
        grid_spec=pltpu.PrefetchScalarGridSpec(
            num_scalar_prefetch=0,
            grid=grid,
            in_specs=[
                # x streams tile-by-tile (double-buffered by the pipeline).
                pl.BlockSpec((tm_eff, IN_FEATURES), lambda i: (i, 0)),
                # Weight / bias stay resident (constant index_map).
                pl.BlockSpec((IN_FEATURES, OUT_FEATURES), lambda i: (0, 0)),
                pl.BlockSpec((1, OUT_FEATURES), lambda i: (0, 0)),
            ],
            out_specs=pl.BlockSpec((tm_eff, OUT_FEATURES), lambda i: (i, 0)),
        ),
        compiler_params=pltpu.CompilerParams(
            dimension_semantics=("parallel",),
            vmem_limit_bytes=vmem_limit,
        ),
        cost_estimate=cost,
    )(x, w_t, b)


def init_params(key):
    """Deterministic nn.Linear(2048, 23)-style init (uniform +/- 1/sqrt(fan_in))."""
    k_w, k_b = jax.random.split(key)
    bound = 1.0 / math.sqrt(IN_FEATURES)
    weight = jax.random.uniform(
        k_w, (OUT_FEATURES, IN_FEATURES), dtype=jnp.float32,
        minval=-bound, maxval=bound)
    bias = jax.random.uniform(
        k_b, (OUT_FEATURES,), dtype=jnp.float32, minval=-bound, maxval=bound)
    return weight, bias


if __name__ == "__main__":
    key = jax.random.PRNGKey(0)
    k_x, k_x2, k_p = jax.random.split(key, 3)

    weight, bias = init_params(k_p)
    w_t, b = prepare_params(weight, bias)   # one-time prep, off the forward path

    fwd = jax.jit(deepheme_transformer_forward)

    def check(x):
        out = jax.block_until_ready(fwd(x, w_t, b))
        assert out.shape == (x.shape[0], OUT_FEATURES), out.shape
        # bf16-consistent reference (same MXU operand path as the kernel).
        ref = jnp.dot(x.astype(jnp.bfloat16), weight.T.astype(jnp.bfloat16),
                      preferred_element_type=jnp.float32) + bias
        err = float(jnp.max(jnp.abs(out - ref)))
        assert jnp.allclose(out, ref, atol=1e-3, rtol=1e-3), err
        # Full-precision reference with a tolerance covering bf16 operand rounding.
        ref32 = x @ weight.T + bias
        err32 = float(jnp.max(jnp.abs(out - ref32)))
        assert jnp.allclose(out, ref32, atol=5e-2, rtol=0.0), err32

    # Small batch of cells: single-tile path.
    check(jax.random.normal(k_x, (16, IN_FEATURES), dtype=jnp.float32))

    # Batch not divisible by TM or 8: multi-tile grid + masked partial edge
    # block (no input padding anywhere).
    check(jax.random.normal(k_x2, (1037, IN_FEATURES), dtype=jnp.float32))

    print("KERNEL_OK")
</pallas_src>

<mosaic_0001>
module attributes {stable_mosaic.version = 11 : i64} {
  func.func @_linear_kernel(%arg0: i32, %arg1: memref<16x2048xf32, #tpu.memory_space<vmem>>, %arg2: memref<2048x23xbf16, #tpu.memory_space<vmem>>, %arg3: memref<1x23xf32, #tpu.memory_space<vmem>>, %arg4: memref<16x23xf32, #tpu.memory_space<vmem>>) attributes {dimension_semantics = [#tpu.dimension_semantics<parallel>], iteration_bounds = array<i64: 1>, scalar_prefetch = 0 : i64, scratch_operands = 0 : i64, tpu.core_type = #tpu.core_type<tc>, window_params = [{transform_indices = @transform_0, window_bounds = array<i64: 16, 2048>}, {pipeline_mode = #tpu.pipeline_mode<synchronous>, transform_indices = @transform_1, window_bounds = array<i64: 2048, 23>}, {pipeline_mode = #tpu.pipeline_mode<synchronous>, transform_indices = @transform_2, window_bounds = array<i64: 1, 23>}, {transform_indices = @transform_3, window_bounds = array<i64: 16, 23>}]} {
    %c0 = arith.constant 0 : index
    %c0_0 = arith.constant 0 : index
    %0 = vector.load %arg1[%c0, %c0_0] : memref<16x2048xf32, #tpu.memory_space<vmem>>, vector<16x2048xf32>
    %1 = arith.truncf %0 : vector<16x2048xf32> to vector<16x2048xbf16>
    %c0_1 = arith.constant 0 : index
    %c0_2 = arith.constant 0 : index
    %2 = vector.load %arg2[%c0_1, %c0_2] : memref<2048x23xbf16, #tpu.memory_space<vmem>>, vector<2048x23xbf16>
    %cst = arith.constant dense<0.000000e+00> : vector<16x23xf32>
    %3 = tpu.matmul %1, %2, %cst {dimension_numbers = #tpu.dot_dimension_numbers<[1], [0], [0], [1], [0, 0, 1, 1], [], []>} : vector<16x2048xbf16>, vector<2048x23xbf16>, vector<16x23xf32> -> vector<16x23xf32>
    %c0_3 = arith.constant 0 : index
    %c0_4 = arith.constant 0 : index
    %4 = vector.load %arg3[%c0_3, %c0_4] : memref<1x23xf32, #tpu.memory_space<vmem>>, vector<1x23xf32>
    %5 = vector.broadcast %4 : vector<1x23xf32> to vector<16x23xf32>
    %6 = arith.addf %3, %5 : vector<16x23xf32>
    %c0_5 = arith.constant 0 : index
    %c0_6 = arith.constant 0 : index
    %7 = vector.load %arg4[%c0_5, %c0_6] : memref<16x23xf32, #tpu.memory_space<vmem>>, vector<16x23xf32>
    tpu.vector_store %arg4[%c0_5, %c0_6], %6 {strides = array<i32>} : memref<16x23xf32, #tpu.memory_space<vmem>>, vector<16x23xf32>,
    return
  }
  func.func @transform_0(%arg0: i32) -> (i32, i32) {
    %c0_i32 = arith.constant 0 : i32
    %c0_i32_0 = arith.constant 0 : i32
    return %arg0, %c0_i32 : i32, i32
  }
  func.func @transform_1(%arg0: i32) -> (i32, i32) {
    %c0_i32 = arith.constant 0 : i32
    %c0_i32_0 = arith.constant 0 : i32
    %c0_i32_1 = arith.constant 0 : i32
    return %c0_i32, %c0_i32_0 : i32, i32
  }
  func.func @transform_2(%arg0: i32) -> (i32, i32) {
    %c0_i32 = arith.constant 0 : i32
    %c0_i32_0 = arith.constant 0 : i32
    %c0_i32_1 = arith.constant 0 : i32
    return %c0_i32, %c0_i32_0 : i32, i32
  }
  func.func @transform_3(%arg0: i32) -> (i32, i32) {
    %c0_i32 = arith.constant 0 : i32
    %c0_i32_0 = arith.constant 0 : i32
    return %arg0, %c0_i32 : i32, i32
  }
}

</mosaic_0001>

<llo_original>
// kernel: deepheme_transformer_forward.1
$region0: #{deepheme_transformer_forward.1}
  #allocation0 [shape = 'u32[]', space=smem, size = 0x4, offset = 0x4, fixed_abs, tag = 'smem constant byte address 0x4 - core index']
  #allocation1 [shape = 'u32[144,128]{1,0:T(1,128)}', space=vmem, size = 0x12000, scoped, tag = 'internal scratch']
  %s0 = inlined_call_operand.vmem [shape: f32[16,2048], index: 0, kind: input, shape index: {}]
  %s1 = inlined_call_operand.vmem [shape: bf16[2048,23], index: 1, kind: input, shape index: {}]
  %s2 = inlined_call_operand.vmem [shape: f32[1,23], index: 2, kind: input, shape index: {}]
  %s3 = inlined_call_operand.hbm [shape: f32[16,23], index: 3, kind: output, shape index: {}]
  %s4 = sld [smem:[#allocation0]]
  $region22: #{deepheme_transformer_forward.1} parent=0
    _
  %s6 = ssub.s32 1, %s4
  %s7 = scalar_select 0, %s6, %s4
  $region1: #{deepheme_transformer_forward.1} parent=0
    #allocation2 [shape = 'u8[8192]{0}', space=vmem, size = 0x2000, scoped, tag = 'output window, operand 0, single buffered']
    #allocation3 [shape = 's32[1]{0}', space=sflag, size = 0x4, scoped, tag = 'scoped memory for deepheme_transformer_forward.1']
    %8 = vsyncpa [#allocation3], 0
    // Predicated region
    $region2: #{deepheme_transformer_forward.1} parent=1 // pred_check
      _
    $region3: #{deepheme_transformer_forward.1} parent=1 // pred_check_branch
      %10 = sbr.rel (0) target = $region5
    $region4: #{deepheme_transformer_forward.1} parent=1 // pred_region
      _
    $region5: #{deepheme_transformer_forward.1} parent=1 // pred_fallthru
      _
    // Predicated region
    $region6: #{deepheme_transformer_forward.1} parent=1 // pred_check
      _
    $region7: #{deepheme_transformer_forward.1} parent=1 // pred_check_branch
      %12 = sbr.rel (0) target = $region9
    $region8: #{deepheme_transformer_forward.1} parent=1 // pred_region
      _
    $region9: #{deepheme_transformer_forward.1} parent=1 // pred_fallthru
      _
    // Predicated region
    $region10: #{deepheme_transformer_forward.1} parent=1 // pred_check
      _
    $region11: #{deepheme_transformer_forward.1} parent=1 // pred_check_branch
      %14 = sbr.rel (0) target = $region13
    $region12: #{deepheme_transformer_forward.1} parent=1 // pred_region
      _
    $region13: #{deepheme_transformer_forward.1} parent=1 // pred_fallthru
      _
    %v16 = vld [vmem:[%s0] sm:$0xff]
    %v17 = vld [vmem:[%s0 + $0x8] sm:$0xff]
    %v18 = vld [vmem:[%s0 + $0x10] sm:$0xff]
    %v19 = vld [vmem:[%s0 + $0x18] sm:$0xff]
    %v20 = vld [vmem:[%s0 + $0x20] sm:$0xff]
    %v21 = vld [vmem:[%s0 + $0x28] sm:$0xff]
    %v22 = vld [vmem:[%s0 + $0x30] sm:$0xff]
    %v23 = vld [vmem:[%s0 + $0x38] sm:$0xff]
    %v24 = vld [vmem:[%s0 + $0x40] sm:$0xff]
    %v25 = vld [vmem:[%s0 + $0x48] sm:$0xff]
    %v26 = vld [vmem:[%s0 + $0x50] sm:$0xff]
    %v27 = vld [vmem:[%s0 + $0x58] sm:$0xff]
    %v28 = vld [vmem:[%s0 + $0x60] sm:$0xff]
    %v29 = vld [vmem:[%s0 + $0x68] sm:$0xff]
    %v30 = vld [vmem:[%s0 + $0x70] sm:$0xff]
    %v31 = vld [vmem:[%s0 + $0x78] sm:$0xff]
    %v32 = vld [vmem:[%s0 + $0x80] sm:$0xff]
    %v33 = vld [vmem:[%s0 + $0x88] sm:$0xff]
    %v34 = vld [vmem:[%s0 + $0x90] sm:$0xff]
    %v35 = vld [vmem:[%s0 + $0x98] sm:$0xff]
    %v36 = vld [vmem:[%s0 + $0xa0] sm:$0xff]
    %v37 = vld [vmem:[%s0 + $0xa8] sm:$0xff]
    %v38 = vld [vmem:[%s0 + $0xb0] sm:$0xff]
    %v39 = vld [vmem:[%s0 + $0xb8] sm:$0xff]
    %v40 = vld [vmem:[%s0 + $0xc0] sm:$0xff]
    %v41 = vld [vmem:[%s0 + $0xc8] sm:$0xff]
    %v42 = vld [vmem:[%s0 + $0xd0] sm:$0xff]
    %v43 = vld [vmem:[%s0 + $0xd8] sm:$0xff]
    %v44 = vld [vmem:[%s0 + $0xe0] sm:$0xff]
    %v45 = vld [vmem:[%s0 + $0xe8] sm:$0xff]
    %v46 = vld [vmem:[%s0 + $0xf0] sm:$0xff]
    %v47 = vld [vmem:[%s0 + $0xf8] sm:$0xff]
    %v48 = vpack.c.bf16 %v32, %v16
    %v49 = vpack.c.bf16 %v33, %v17
    %v50 = vpack.c.bf16 %v34, %v18
    %v51 = vpack.c.bf16 %v35, %v19
    %v52 = vpack.c.bf16 %v36, %v20
    %v53 = vpack.c.bf16 %v37, %v21
    %v54 = vpack.c.bf16 %v38, %v22
    %v55 = vpack.c.bf16 %v39, %v23
    %v56 = vpack.c.bf16 %v40, %v24
    %v57 = vpack.c.bf16 %v41, %v25
    %v58 = vpack.c.bf16 %v42, %v26
    %v59 = vpack.c.bf16 %v43, %v27
    %v60 = vpack.c.bf16 %v44, %v28
    %v61 = vpack.c.bf16 %v45, %v29
    %v62 = vpack.c.bf16 %v46, %v30
    %v63 = vpack.c.bf16 %v47, %v31
    %v64 = vld [vmem:[%s1] sm:$0xf]
    %v65 = vld [vmem:[%s1 + $0x4] sm:$0xf]
    %v66 = vld [vmem:[%s1 + $0x8] sm:$0xf]
    %v67 = vld [vmem:[%s1 + $0xc] sm:$0xf]
    %v68 = vld [vmem:[%s1 + $0x10] sm:$0xf]
    %v69 = vld [vmem:[%s1 + $0x14] sm:$0xf]
    %v70 = vld [vmem:[%s1 + $0x18] sm:$0xf]
    %v71 = vld [vmem:[%s1 + $0x1c] sm:$0xf]
    %v72 = vld [vmem:[%s1 + $0x20] sm:$0xf]
    %v73 = vld [vmem:[%s1 + $0x24] sm:$0xf]
    %v74 = vld [vmem:[%s1 + $0x28] sm:$0xf]
    %v75 = vld [vmem:[%s1 + $0x2c] sm:$0xf]
    %v76 = vld [vmem:[%s1 + $0x30] sm:$0xf]
    %v77 = vld [vmem:[%s1 + $0x34] sm:$0xf]
    %v78 = vld [vmem:[%s1 + $0x38] sm:$0xf]
    %v79 = vld [vmem:[%s1 + $0x3c] sm:$0xf]
    %v80 = vld [vmem:[%s1 + $0x40] sm:$0xf]
    %v81 = vld [vmem:[%s1 + $0x44] sm:$0xf]
    %v82 = vld [vmem:[%s1 + $0x48] sm:$0xf]
    %v83 = vld [vmem:[%s1 + $0x4c] sm:$0xf]
    %v84 = vld [vmem:[%s1 + $0x50] sm:$0xf]
    %v85 = vld [vmem:[%s1 + $0x54] sm:$0xf]
    %v86 = vld [vmem:[%s1 + $0x58] sm:$0xf]
    %v87 = vld [vmem:[%s1 + $0x5c] sm:$0xf]
    %v88 = vld [vmem:[%s1 + $0x60] sm:$0xf]
    %v89 = vld [vmem:[%s1 + $0x64] sm:$0xf]
    %v90 = vld [vmem:[%s1 + $0x68] sm:$0xf]
    %v91 = vld [vmem:[%s1 + $0x6c] sm:$0xf]
    %v92 = vld [vmem:[%s1 + $0x70] sm:$0xf]
    %v93 = vld [vmem:[%s1 + $0x74] sm:$0xf]
    %v94 = vld [vmem:[%s1 + $0x78] sm:$0xf]
    %v95 = vld [vmem:[%s1 + $0x7c] sm:$0xf]
    %v96 = vld [vmem:[%s1 + $0x80] sm:$0xf]
    %v97 = vld [vmem:[%s1 + $0x84] sm:$0xf]
    %v98 = vld [vmem:[%s1 + $0x88] sm:$0xf]
    %v99 = vld [vmem:[%s1 + $0x8c] sm:$0xf]
    %v100 = vld [vmem:[%s1 + $0x90] sm:$0xf]
    %v101 = vld [vmem:[%s1 + $0x94] sm:$0xf]
    %v102 = vld [vmem:[%s1 + $0x98] sm:$0xf]
    %v103 = vld [vmem:[%s1 + $0x9c] sm:$0xf]
    %v104 = vld [vmem:[%s1 + $0xa0] sm:$0xf]
    %v105 = vld [vmem:[%s1 + $0xa4] sm:$0xf]
    %v106 = vld [vmem:[%s1 + $0xa8] sm:$0xf]
    %v107 = vld [vmem:[%s1 + $0xac] sm:$0xf]
    %v108 = vld [vmem:[%s1 + $0xb0] sm:$0xf]
    %v109 = vld [vmem:[%s1 + $0xb4] sm:$0xf]
    %v110 = vld [vmem:[%s1 + $0xb8] sm:$0xf]
    %v111 = vld [vmem:[%s1 + $0xbc] sm:$0xf]
    %v112 = vld [vmem:[%s1 + $0xc0] sm:$0xf]
    %v113 = vld [vmem:[%s1 + $0xc4] sm:$0xf]
    %v114 = vld [vmem:[%s1 + $0xc8] sm:$0xf]
    %v115 = vld [vmem:[%s1 + $0xcc] sm:$0xf]
    %v116 = vld [vmem:[%s1 + $0xd0] sm:$0xf]
    %v117 = vld [vmem:[%s1 + $0xd4] sm:$0xf]
    %v118 = vld [vmem:[%s1 + $0xd8] sm:$0xf]
    %v119 = vld [vmem:[%s1 + $0xdc] sm:$0xf]
    %v120 = vld [vmem:[%s1 + $0xe0] sm:$0xf]
    %v121 = vld [vmem:[%s1 + $0xe4] sm:$0xf]
    %v122 = vld [vmem:[%s1 + $0xe8] sm:$0xf]
    %v123 = vld [vmem:[%s1 + $0xec] sm:$0xf]
    %v124 = vld [vmem:[%s1 + $0xf0] sm:$0xf]
    %v125 = vld [vmem:[%s1 + $0xf4] sm:$0xf]
    %v126 = vld [vmem:[%s1 + $0xf8] sm:$0xf]
    %v127 = vld [vmem:[%s1 + $0xfc] sm:$0xf]
    %v128 = vld [vmem:[%s1 + $0x100] sm:$0xf]
    %v129 = vld [vmem:[%s1 + $0x104] sm:$0xf]
    %v130 = vld [vmem:[%s1 + $0x108] sm:$0xf]
    %v131 = vld [vmem:[%s1 + $0x10c] sm:$0xf]
    %v132 = vld [vmem:[%s1 + $0x110] sm:$0xf]
    %v133 = vld [vmem:[%s1 + $0x114] sm:$0xf]
    %v134 = vld [vmem:[%s1 + $0x118] sm:$0xf]
    %v135 = vld [vmem:[%s1 + $0x11c] sm:$0xf]
    %v136 = vld [vmem:[%s1 + $0x120] sm:$0xf]
    %v137 = vld [vmem:[%s1 + $0x124] sm:$0xf]
    %v138 = vld [vmem:[%s1 + $0x128] sm:$0xf]
    %v139 = vld [vmem:[%s1 + $0x12c] sm:$0xf]
    %v140 = vld [vmem:[%s1 + $0x130] sm:$0xf]
    %v141 = vld [vmem:[%s1 + $0x134] sm:$0xf]
    %v142 = vld [vmem:[%s1 + $0x138] sm:$0xf]
    %v143 = vld [vmem:[%s1 + $0x13c] sm:$0xf]
    %v144 = vld [vmem:[%s1 + $0x140] sm:$0xf]
    %v145 = vld [vmem:[%s1 + $0x144] sm:$0xf]
    %v146 = vld [vmem:[%s1 + $0x148] sm:$0xf]
    %v147 = vld [vmem:[%s1 + $0x14c] sm:$0xf]
    %v148 = vld [vmem:[%s1 + $0x150] sm:$0xf]
    %v149 = vld [vmem:[%s1 + $0x154] sm:$0xf]
    %v150 = vld [vmem:[%s1 + $0x158] sm:$0xf]
    %v151 = vld [vmem:[%s1 + $0x15c] sm:$0xf]
    %v152 = vld [vmem:[%s1 + $0x160] sm:$0xf]
    %v153 = vld [vmem:[%s1 + $0x164] sm:$0xf]
    %v154 = vld [vmem:[%s1 + $0x168] sm:$0xf]
    %v155 = vld [vmem:[%s1 + $0x16c] sm:$0xf]
    %v156 = vld [vmem:[%s1 + $0x170] sm:$0xf]
    %v157 = vld [vmem:[%s1 + $0x174] sm:$0xf]
    %v158 = vld [vmem:[%s1 + $0x178] sm:$0xf]
    %v159 = vld [vmem:[%s1 + $0x17c] sm:$0xf]
    %v160 = vld [vmem:[%s1 + $0x180] sm:$0xf]
    %v161 = vld [vmem:[%s1 + $0x184] sm:$0xf]
    %v162 = vld [vmem:[%s1 + $0x188] sm:$0xf]
    %v163 = vld [vmem:[%s1 + $0x18c] sm:$0xf]
    %v164 = vld [vmem:[%s1 + $0x190] sm:$0xf]
    %v165 = vld [vmem:[%s1 + $0x194] sm:$0xf]
    %v166 = vld [vmem:[%s1 + $0x198] sm:$0xf]
    %v167 = vld [vmem:[%s1 + $0x19c] sm:$0xf]
    %v168 = vld [vmem:[%s1 + $0x1a0] sm:$0xf]
    %v169 = vld [vmem:[%s1 + $0x1a4] sm:$0xf]
    %v170 = vld [vmem:[%s1 + $0x1a8] sm:$0xf]
    %v171 = vld [vmem:[%s1 + $0x1ac] sm:$0xf]
    %v172 = vld [vmem:[%s1 + $0x1b0] sm:$0xf]
    %v173 = vld [vmem:[%s1 + $0x1b4] sm:$0xf]
    %v174 = vld [vmem:[%s1 + $0x1b8] sm:$0xf]
    %v175 = vld [vmem:[%s1 + $0x1bc] sm:$0xf]
    %v176 = vld [vmem:[%s1 + $0x1c0] sm:$0xf]
    %v177 = vld [vmem:[%s1 + $0x1c4] sm:$0xf]
    %v178 = vld [vmem:[%s1 + $0x1c8] sm:$0xf]
    %v179 = vld [vmem:[%s1 + $0x1cc] sm:$0xf]
    %v180 = vld [vmem:[%s1 + $0x1d0] sm:$0xf]
    %v181 = vld [vmem:[%s1 + $0x1d4] sm:$0xf]
    %v182 = vld [vmem:[%s1 + $0x1d8] sm:$0xf]
    %v183 = vld [vmem:[%s1 + $0x1dc] sm:$0xf]
    %v184 = vld [vmem:[%s1 + $0x1e0] sm:$0xf]
    %v185 = vld [vmem:[%s1 + $0x1e4] sm:$0xf]
    %v186 = vld [vmem:[%s1 + $0x1e8] sm:$0xf]
    %v187 = vld [vmem:[%s1 + $0x1ec] sm:$0xf]
    %v188 = vld [vmem:[%s1 + $0x1f0] sm:$0xf]
    %v189 = vld [vmem:[%s1 + $0x1f4] sm:$0xf]
    %v190 = vld [vmem:[%s1 + $0x1f8] sm:$0xf]
    %v191 = vld [vmem:[%s1 + $0x1fc] sm:$0xf]
    %v192 = vld [vmem:[%s1 + $0x200] sm:$0xf]
    %v193 = vld [vmem:[%s1 + $0x204] sm:$0xf]
    %v194 = vld [vmem:[%s1 + $0x208] sm:$0xf]
    %v195 = vld [vmem:[%s1 + $0x20c] sm:$0xf]
    %v196 = vld [vmem:[%s1 + $0x210] sm:$0xf]
    %v197 = vld [vmem:[%s1 + $0x214] sm:$0xf]
    %v198 = vld [vmem:[%s1 + $0x218] sm:$0xf]
    %v199 = vld [vmem:[%s1 + $0x21c] sm:$0xf]
    %v200 = vld [vmem:[%s1 + $0x220] sm:$0xf]
    %v201 = vld [vmem:[%s1 + $0x224] sm:$0xf]
    %v202 = vld [vmem:[%s1 + $0x228] sm:$0xf]
    %v203 = vld [vmem:[%s1 + $0x22c] sm:$0xf]
    %v204 = vld [vmem:[%s1 + $0x230] sm:$0xf]
    %v205 = vld [vmem:[%s1 + $0x234] sm:$0xf]
    %v206 = vld [vmem:[%s1 + $0x238] sm:$0xf]
    %v207 = vld [vmem:[%s1 + $0x23c] sm:$0xf]
    %v208 = vld [vmem:[%s1 + $0x240] sm:$0xf]
    %v209 = vld [vmem:[%s1 + $0x244] sm:$0xf]
    %v210 = vld [vmem:[%s1 + $0x248] sm:$0xf]
    %v211 = vld [vmem:[%s1 + $0x24c] sm:$0xf]
    %v212 = vld [vmem:[%s1 + $0x250] sm:$0xf]
    %v213 = vld [vmem:[%s1 + $0x254] sm:$0xf]
    %v214 = vld [vmem:[%s1 + $0x258] sm:$0xf]
    %v215 = vld [vmem:[%s1 + $0x25c] sm:$0xf]
    %v216 = vld [vmem:[%s1 + $0x260] sm:$0xf]
    %v217 = vld [vmem:[%s1 + $0x264] sm:$0xf]
    %v218 = vld [vmem:[%s1 + $0x268] sm:$0xf]
    %v219 = vld [vmem:[%s1 + $0x26c] sm:$0xf]
    %v220 = vld [vmem:[%s1 + $0x270] sm:$0xf]
    %v221 = vld [vmem:[%s1 + $0x274] sm:$0xf]
    %v222 = vld [vmem:[%s1 + $0x278] sm:$0xf]
    %v223 = vld [vmem:[%s1 + $0x27c] sm:$0xf]
    %v224 = vld [vmem:[%s1 + $0x280] sm:$0xf]
    %v225 = vld [vmem:[%s1 + $0x284] sm:$0xf]
    %v226 = vld [vmem:[%s1 + $0x288] sm:$0xf]
    %v227 = vld [vmem:[%s1 + $0x28c] sm:$0xf]
    %v228 = vld [vmem:[%s1 + $0x290] sm:$0xf]
    %v229 = vld [vmem:[%s1 + $0x294] sm:$0xf]
    %v230 = vld [vmem:[%s1 + $0x298] sm:$0xf]
    %v231 = vld [vmem:[%s1 + $0x29c] sm:$0xf]
    %v232 = vld [vmem:[%s1 + $0x2a0] sm:$0xf]
    %v233 = vld [vmem:[%s1 + $0x2a4] sm:$0xf]
    %v234 = vld [vmem:[%s1 + $0x2a8] sm:$0xf]
    %v235 = vld [vmem:[%s1 + $0x2ac] sm:$0xf]
    %v236 = vld [vmem:[%s1 + $0x2b0] sm:$0xf]
    %v237 = vld [vmem:[%s1 + $0x2b4] sm:$0xf]
    %v238 = vld [vmem:[%s1 + $0x2b8] sm:$0xf]
    %v239 = vld [vmem:[%s1 + $0x2bc] sm:$0xf]
    %v240 = vld [vmem:[%s1 + $0x2c0] sm:$0xf]
    %v241 = vld [vmem:[%s1 + $0x2c4] sm:$0xf]
    %v242 = vld [vmem:[%s1 + $0x2c8] sm:$0xf]
    %v243 = vld [vmem:[%s1 + $0x2cc] sm:$0xf]
    %v244 = vld [vmem:[%s1 + $0x2d0] sm:$0xf]
    %v245 = vld [vmem:[%s1 + $0x2d4] sm:$0xf]
    %v246 = vld [vmem:[%s1 + $0x2d8] sm:$0xf]
    %v247 = vld [vmem:[%s1 + $0x2dc] sm:$0xf]
    %v248 = vld [vmem:[%s1 + $0x2e0] sm:$0xf]
    %v249 = vld [vmem:[%s1 + $0x2e4] sm:$0xf]
    %v250 = vld [vmem:[%s1 + $0x2e8] sm:$0xf]
    %v251 = vld [vmem:[%s1 + $0x2ec] sm:$0xf]
    %v252 = vld [vmem:[%s1 + $0x2f0] sm:$0xf]
    %v253 = vld [vmem:[%s1 + $0x2f4] sm:$0xf]
    %v254 = vld [vmem:[%s1 + $0x2f8] sm:$0xf]
    %v255 = vld [vmem:[%s1 + $0x2fc] sm:$0xf]
    %v256 = vld [vmem:[%s1 + $0x300] sm:$0xf]
    %v257 = vld [vmem:[%s1 + $0x304] sm:$0xf]
    %v258 = vld [vmem:[%s1 + $0x308] sm:$0xf]
    %v259 = vld [vmem:[%s1 + $0x30c] sm:$0xf]
    %v260 = vld [vmem:[%s1 + $0x310] sm:$0xf]
    %v261 = vld [vmem:[%s1 + $0x314] sm:$0xf]
    %v262 = vld [vmem:[%s1 + $0x318] sm:$0xf]
    %v263 = vld [vmem:[%s1 + $0x31c] sm:$0xf]
    %v264 = vld [vmem:[%s1 + $0x320] sm:$0xf]
    %v265 = vld [vmem:[%s1 + $0x324] sm:$0xf]
    %v266 = vld [vmem:[%s1 + $0x328] sm:$0xf]
    %v267 = vld [vmem:[%s1 + $0x32c] sm:$0xf]
    %v268 = vld [vmem:[%s1 + $0x330] sm:$0xf]
    %v269 = vld [vmem:[%s1 + $0x334] sm:$0xf]
    %v270 = vld [vmem:[%s1 + $0x338] sm:$0xf]
    %v271 = vld [vmem:[%s1 + $0x33c] sm:$0xf]
    %v272 = vld [vmem:[%s1 + $0x340] sm:$0xf]
    %v273 = vld [vmem:[%s1 + $0x344] sm:$0xf]
    %v274 = vld [vmem:[%s1 + $0x348] sm:$0xf]
    %v275 = vld [vmem:[%s1 + $0x34c] sm:$0xf]
    %v276 = vld [vmem:[%s1 + $0x350] sm:$0xf]
    %v277 = vld [vmem:[%s1 + $0x354] sm:$0xf]
    %v278 = vld [vmem:[%s1 + $0x358] sm:$0xf]
    %v279 = vld [vmem:[%s1 + $0x35c] sm:$0xf]
    %v280 = vld [vmem:[%s1 + $0x360] sm:$0xf]
    %v281 = vld [vmem:[%s1 + $0x364] sm:$0xf]
    %v282 = vld [vmem:[%s1 + $0x368] sm:$0xf]
    %v283 = vld [vmem:[%s1 + $0x36c] sm:$0xf]
    %v284 = vld [vmem:[%s1 + $0x370] sm:$0xf]
    %v285 = vld [vmem:[%s1 + $0x374] sm:$0xf]
    %v286 = vld [vmem:[%s1 + $0x378] sm:$0xf]
    %v287 = vld [vmem:[%s1 + $0x37c] sm:$0xf]
    %v288 = vld [vmem:[%s1 + $0x380] sm:$0xf]
    %v289 = vld [vmem:[%s1 + $0x384] sm:$0xf]
    %v290 = vld [vmem:[%s1 + $0x388] sm:$0xf]
    %v291 = vld [vmem:[%s1 + $0x38c] sm:$0xf]
    %v292 = vld [vmem:[%s1 + $0x390] sm:$0xf]
    %v293 = vld [vmem:[%s1 + $0x394] sm:$0xf]
    %v294 = vld [vmem:[%s1 + $0x398] sm:$0xf]
    %v295 = vld [vmem:[%s1 + $0x39c] sm:$0xf]
    %v296 = vld [vmem:[%s1 + $0x3a0] sm:$0xf]
    %v297 = vld [vmem:[%s1 + $0x3a4] sm:$0xf]
    %v298 = vld [vmem:[%s1 + $0x3a8] sm:$0xf]
    %v299 = vld [vmem:[%s1 + $0x3ac] sm:$0xf]
    %v300 = vld [vmem:[%s1 + $0x3b0] sm:$0xf]
    %v301 = vld [vmem:[%s1 + $0x3b4] sm:$0xf]
    %v302 = vld [vmem:[%s1 + $0x3b8] sm:$0xf]
    %v303 = vld [vmem:[%s1 + $0x3bc] sm:$0xf]
    %v304 = vld [vmem:[%s1 + $0x3c0] sm:$0xf]
    %v305 = vld [vmem:[%s1 + $0x3c4] sm:$0xf]
    %v306 = vld [vmem:[%s1 + $0x3c8] sm:$0xf]
    %v307 = vld [vmem:[%s1 + $0x3cc] sm:$0xf]
    %v308 = vld [vmem:[%s1 + $0x3d0] sm:$0xf]
    %v309 = vld [vmem:[%s1 + $0x3d4] sm:$0xf]
    %v310 = vld [vmem:[%s1 + $0x3d8] sm:$0xf]
    %v311 = vld [vmem:[%s1 + $0x3dc] sm:$0xf]
    %v312 = vld [vmem:[%s1 + $0x3e0] sm:$0xf]
    %v313 = vld [vmem:[%s1 + $0x3e4] sm:$0xf]
    %v314 = vld [vmem:[%s1 + $0x3e8] sm:$0xf]
    %v315 = vld [vmem:[%s1 + $0x3ec] sm:$0xf]
    %v316 = vld [vmem:[%s1 + $0x3f0] sm:$0xf]
    %v317 = vld [vmem:[%s1 + $0x3f4] sm:$0xf]
    %v318 = vld [vmem:[%s1 + $0x3f8] sm:$0xf]
    %v319 = vld [vmem:[%s1 + $0x3fc] sm:$0xf]
    %v320 = vld [vmem:[%s2] sm:$0x1]
    %v322 = vlaneseq
    %v323 = vshrl.u32 %v322, 7
    %v324 = vsub.s32 0, %v323
    %v325 = vrot.slane %v320, %v324
    %v583 = vunpack.c.l.b16 %v64
    %v584 = vunpack.c.l.b16 %v65
    %v585 = vunpack.c.l.b16 %v66
    %v586 = vunpack.c.l.b16 %v67
    %v587 = vunpack.c.l.b16 %v68
    %v588 = vunpack.c.l.b16 %v69
    %v589 = vunpack.c.l.b16 %v70
    %v590 = vunpack.c.l.b16 %v71
    %v591 = vunpack.c.l.b16 %v72
    %v592 = vunpack.c.l.b16 %v73
    %v593 = vunpack.c.l.b16 %v74
    %v594 = vunpack.c.l.b16 %v75
    %v595 = vunpack.c.l.b16 %v76
    %v596 = vunpack.c.l.b16 %v77
    %v597 = vunpack.c.l.b16 %v78
    %v598 = vunpack.c.l.b16 %v79
    %v599 = vunpack.c.l.b16 %v80
    %v600 = vunpack.c.l.b16 %v81
    %v601 = vunpack.c.l.b16 %v82
    %v602 = vunpack.c.l.b16 %v83
    %v603 = vunpack.c.l.b16 %v84
    %v604 = vunpack.c.l.b16 %v85
    %v605 = vunpack.c.l.b16 %v86
    %v606 = vunpack.c.l.b16 %v87
    %v607 = vunpack.c.l.b16 %v88
    %v608 = vunpack.c.l.b16 %v89
    %v609 = vunpack.c.l.b16 %v90
    %v610 = vunpack.c.l.b16 %v91
    %v611 = vunpack.c.l.b16 %v92
    %v612 = vunpack.c.l.b16 %v93
    %v613 = vunpack.c.l.b16 %v94
    %v614 = vunpack.c.l.b16 %v95
    %v615 = vunpack.c.l.b16 %v96
    %v616 = vunpack.c.l.b16 %v97
    %v617 = vunpack.c.l.b16 %v98
    %v618 = vunpack.c.l.b16 %v99
    %v619 = vunpack.c.l.b16 %v100
    %v620 = vunpack.c.l.b16 %v101
    %v621 = vunpack.c.l.b16 %v102
    %v622 = vunpack.c.l.b16 %v103
    %v623 = vunpack.c.l.b16 %v104
    %v624 = vunpack.c.l.b16 %v105
    %v625 = vunpack.c.l.b16 %v106
    %v626 = vunpack.c.l.b16 %v107
    %v627 = vunpack.c.l.b16 %v108
    %v628 = vunpack.c.l.b16 %v109
    %v629 = vunpack.c.l.b16 %v110
    %v630 = vunpack.c.l.b16 %v111
    %v631 = vunpack.c.l.b16 %v112
    %v632 = vunpack.c.l.b16 %v113
    %v633 = vunpack.c.l.b16 %v114
    %v634 = vunpack.c.l.b16 %v115
    %v635 = vunpack.c.l.b16 %v116
    %v636 = vunpack.c.l.b16 %v117
    %v637 = vunpack.c.l.b16 %v118
    %v638 = vunpack.c.l.b16 %v119
    %v639 = vunpack.c.l.b16 %v120
    %v640 = vunpack.c.l.b16 %v121
    %v641 = vunpack.c.l.b16 %v122
    %v642 = vunpack.c.l.b16 %v123
    %v643 = vunpack.c.l.b16 %v124
    %v644 = vunpack.c.l.b16 %v125
    %v645 = vunpack.c.l.b16 %v126
    %v646 = vunpack.c.l.b16 %v127
    %v647 = vunpack.c.l.b16 %v128
    %v648 = vunpack.c.l.b16 %v129
    %v649 = vunpack.c.l.b16 %v130
    %v650 = vunpack.c.l.b16 %v131
    %v651 = vunpack.c.l.b16 %v132
    %v652 = vunpack.c.l.b16 %v133
    %v653 = vunpack.c.l.b16 %v134
    %v654 = vunpack.c.l.b16 %v135
    %v655 = vunpack.c.l.b16 %v136
    %v656 = vunpack.c.l.b16 %v137
    %v657 = vunpack.c.l.b16 %v138
    %v658 = vunpack.c.l.b16 %v139
    %v659 = vunpack.c.l.b16 %v140
    %v660 = vunpack.c.l.b16 %v141
    %v661 = vunpack.c.l.b16 %v142
    %v662 = vunpack.c.l.b16 %v143
    %v663 = vunpack.c.l.b16 %v144
    %v664 = vunpack.c.l.b16 %v145
    %v665 = vunpack.c.l.b16 %v146
    %v666 = vunpack.c.l.b16 %v147
    %v667 = vunpack.c.l.b16 %v148
    %v668 = vunpack.c.l.b16 %v149
    %v669 = vunpack.c.l.b16 %v150
    %v670 = vunpack.c.l.b16 %v151
    %v671 = vunpack.c.l.b16 %v152
    %v672 = vunpack.c.l.b16 %v153
    %v673 = vunpack.c.l.b16 %v154
    %v674 = vunpack.c.l.b16 %v155
    %v675 = vunpack.c.l.b16 %v156
    %v676 = vunpack.c.l.b16 %v157
    %v677 = vunpack.c.l.b16 %v158
    %v678 = vunpack.c.l.b16 %v159
    %v679 = vunpack.c.l.b16 %v160
    %v680 = vunpack.c.l.b16 %v161
    %v681 = vunpack.c.l.b16 %v162
    %v682 = vunpack.c.l.b16 %v163
    %v683 = vunpack.c.l.b16 %v164
    %v684 = vunpack.c.l.b16 %v165
    %v685 = vunpack.c.l.b16 %v166
    %v686 = vunpack.c.l.b16 %v167
    %v687 = vunpack.c.l.b16 %v168
    %v688 = vunpack.c.l.b16 %v169
    %v689 = vunpack.c.l.b16 %v170
    %v690 = vunpack.c.l.b16 %v171
    %v691 = vunpack.c.l.b16 %v172
    %v692 = vunpack.c.l.b16 %v173
    %v693 = vunpack.c.l.b16 %v174
    %v694 = vunpack.c.l.b16 %v175
    %v695 = vunpack.c.l.b16 %v176
    %v696 = vunpack.c.l.b16 %v177
    %v697 = vunpack.c.l.b16 %v178
    %v698 = vunpack.c.l.b16 %v179
    %v699 = vunpack.c.l.b16 %v180
    %v700 = vunpack.c.l.b16 %v181
    %v701 = vunpack.c.l.b16 %v182
    %v702 = vunpack.c.l.b16 %v183
    %v703 = vunpack.c.l.b16 %v184
    %v704 = vunpack.c.l.b16 %v185
    %v705 = vunpack.c.l.b16 %v186
    %v706 = vunpack.c.l.b16 %v187
    %v707 = vunpack.c.l.b16 %v188
    %v708 = vunpack.c.l.b16 %v189
    %v709 = vunpack.c.l.b16 %v190
    %v710 = vunpack.c.l.b16 %v191
    %v711 = vunpack.c.l.b16 %v192
    %v712 = vunpack.c.l.b16 %v193
    %v713 = vunpack.c.l.b16 %v194
    %v714 = vunpack.c.l.b16 %v195
    %v715 = vunpack.c.l.b16 %v196
    %v716 = vunpack.c.l.b16 %v197
    %v717 = vunpack.c.l.b16 %v198
    %v718 = vunpack.c.l.b16 %v199
    %v719 = vunpack.c.l.b16 %v200
    %v720 = vunpack.c.l.b16 %v201
    %v721 = vunpack.c.l.b16 %v202
    %v722 = vunpack.c.l.b16 %v203
    %v723 = vunpack.c.l.b16 %v204
    %v724 = vunpack.c.l.b16 %v205
    %v725 = vunpack.c.l.b16 %v206
    %v726 = vunpack.c.l.b16 %v207
    %v727 = vunpack.c.l.b16 %v208
    %v728 = vunpack.c.l.b16 %v209
    %v729 = vunpack.c.l.b16 %v210
    %v730 = vunpack.c.l.b16 %v211
    %v731 = vunpack.c.l.b16 %v212
    %v732 = vunpack.c.l.b16 %v213
    %v733 = vunpack.c.l.b16 %v214
    %v734 = vunpack.c.l.b16 %v215
    %v735 = vunpack.c.l.b16 %v216
    %v736 = vunpack.c.l.b16 %v217
    %v737 = vunpack.c.l.b16 %v218
    %v738 = vunpack.c.l.b16 %v219
    %v739 = vunpack.c.l.b16 %v220
    %v740 = vunpack.c.l.b16 %v221
    %v741 = vunpack.c.l.b16 %v222
    %v742 = vunpack.c.l.b16 %v223
    %v743 = vunpack.c.l.b16 %v224
    %v744 = vunpack.c.l.b16 %v225
    %v745 = vunpack.c.l.b16 %v226
    %v746 = vunpack.c.l.b16 %v227
    %v747 = vunpack.c.l.b16 %v228
    %v748 = vunpack.c.l.b16 %v229
    %v749 = vunpack.c.l.b16 %v230
    %v750 = vunpack.c.l.b16 %v231
    %v751 = vunpack.c.l.b16 %v232
    %v752 = vunpack.c.l.b16 %v233
    %v753 = vunpack.c.l.b16 %v234
    %v754 = vunpack.c.l.b16 %v235
    %v755 = vunpack.c.l.b16 %v236
    %v756 = vunpack.c.l.b16 %v237
    %v757 = vunpack.c.l.b16 %v238
    %v758 = vunpack.c.l.b16 %v239
    %v759 = vunpack.c.l.b16 %v240
    %v760 = vunpack.c.l.b16 %v241
    %v761 = vunpack.c.l.b16 %v242
    %v762 = vunpack.c.l.b16 %v243
    %v763 = vunpack.c.l.b16 %v244
    %v764 = vunpack.c.l.b16 %v245
    %v765 = vunpack.c.l.b16 %v246
    %v766 = vunpack.c.l.b16 %v247
    %v767 = vunpack.c.l.b16 %v248
    %v768 = vunpack.c.l.b16 %v249
    %v769 = vunpack.c.l.b16 %v250
    %v770 = vunpack.c.l.b16 %v251
    %v771 = vunpack.c.l.b16 %v252
    %v772 = vunpack.c.l.b16 %v253
    %v773 = vunpack.c.l.b16 %v254
    %v774 = vunpack.c.l.b16 %v255
    %v775 = vunpack.c.l.b16 %v256
    %v776 = vunpack.c.l.b16 %v257
    %v777 = vunpack.c.l.b16 %v258
    %v778 = vunpack.c.l.b16 %v259
    %v779 = vunpack.c.l.b16 %v260
    %v780 = vunpack.c.l.b16 %v261
    %v781 = vunpack.c.l.b16 %v262
    %v782 = vunpack.c.l.b16 %v263
    %v783 = vunpack.c.l.b16 %v264
    %v784 = vunpack.c.l.b16 %v265
    %v785 = vunpack.c.l.b16 %v266
    %v786 = vunpack.c.l.b16 %v267
    %v787 = vunpack.c.l.b16 %v268
    %v788 = vunpack.c.l.b16 %v269
    %v789 = vunpack.c.l.b16 %v270
    %v790 = vunpack.c.l.b16 %v271
    %v791 = vunpack.c.l.b16 %v272
    %v792 = vunpack.c.l.b16 %v273
    %v793 = vunpack.c.l.b16 %v274
    %v794 = vunpack.c.l.b16 %v275
    %v795 = vunpack.c.l.b16 %v276
    %v796 = vunpack.c.l.b16 %v277
    %v797 = vunpack.c.l.b16 %v278
    %v798 = vunpack.c.l.b16 %v279
    %v799 = vunpack.c.l.b16 %v280
    %v800 = vunpack.c.l.b16 %v281
    %v801 = vunpack.c.l.b16 %v282
    %v802 = vunpack.c.l.b16 %v283
    %v803 = vunpack.c.l.b16 %v284
    %v804 = vunpack.c.l.b16 %v285
    %v805 = vunpack.c.l.b16 %v286
    %v806 = vunpack.c.l.b16 %v287
    %v807 = vunpack.c.l.b16 %v288
    %v808 = vunpack.c.l.b16 %v289
    %v809 = vunpack.c.l.b16 %v290
    %v810 = vunpack.c.l.b16 %v291
    %v811 = vunpack.c.l.b16 %v292
    %v812 = vunpack.c.l.b16 %v293
    %v813 = vunpack.c.l.b16 %v294
    %v814 = vunpack.c.l.b16 %v295
    %v815 = vunpack.c.l.b16 %v296
    %v816 = vunpack.c.l.b16 %v297
    %v817 = vunpack.c.l.b16 %v298
    %v818 = vunpack.c.l.b16 %v299
    %v819 = vunpack.c.l.b16 %v300
    %v820 = vunpack.c.l.b16 %v301
    %v821 = vunpack.c.l.b16 %v302
    %v822 = vunpack.c.l.b16 %v303
    %v823 = vunpack.c.l.b16 %v304
    %v824 = vunpack.c.l.b16 %v305
    %v825 = vunpack.c.l.b16 %v306
    %v826 = vunpack.c.l.b16 %v307
    %v827 = vunpack.c.l.b16 %v308
    %v828 = vunpack.c.l.b16 %v309
    %v829 = vunpack.c.l.b16 %v310
    %v830 = vunpack.c.l.b16 %v311
    %v831 = vunpack.c.l.b16 %v312
    %v832 = vunpack.c.l.b16 %v313
    %v833 = vunpack.c.l.b16 %v314
    %v834 = vunpack.c.l.b16 %v315
    %v835 = vunpack.c.l.b16 %v316
    %v836 = vunpack.c.l.b16 %v317
    %v837 = vunpack.c.l.b16 %v318
    %v838 = vunpack.c.l.b16 %v319
    %v839 = vpack.c.b16 %v584, %v583
    %v840 = vpack.c.b16 %v586, %v585
    %v841 = vpack.c.b16 %v588, %v587
    %v842 = vpack.c.b16 %v590, %v589
    %v843 = vpack.c.b16 %v592, %v591
    %v844 = vpack.c.b16 %v594, %v593
    %v845 = vpack.c.b16 %v596, %v595
    %v846 = vpack.c.b16 %v598, %v597
    %v847 = vpack.c.b16 %v600, %v599
    %v848 = vpack.c.b16 %v602, %v601
    %v849 = vpack.c.b16 %v604, %v603
    %v850 = vpack.c.b16 %v606, %v605
    %v851 = vpack.c.b16 %v608, %v607
    %v852 = vpack.c.b16 %v610, %v609
    %v853 = vpack.c.b16 %v612, %v611
    %v854 = vpack.c.b16 %v614, %v613
    %v855 = vpack.c.b16 %v616, %v615
    %v856 = vpack.c.b16 %v618, %v617
    %v857 = vpack.c.b16 %v620, %v619
    %v858 = vpack.c.b16 %v622, %v621
    %v859 = vpack.c.b16 %v624, %v623
    %v860 = vpack.c.b16 %v626, %v625
    %v861 = vpack.c.b16 %v628, %v627
    %v862 = vpack.c.b16 %v630, %v629
    %v863 = vpack.c.b16 %v632, %v631
    %v864 = vpack.c.b16 %v634, %v633
    %v865 = vpack.c.b16 %v636, %v635
    %v866 = vpack.c.b16 %v638, %v637
    %v867 = vpack.c.b16 %v640, %v639
    %v868 = vpack.c.b16 %v642, %v641
    %v869 = vpack.c.b16 %v644, %v643
    %v870 = vpack.c.b16 %v646, %v645
    %v871 = vpack.c.b16 %v648, %v647
    %v872 = vpack.c.b16 %v650, %v649
    %v873 = vpack.c.b16 %v652, %v651
    %v874 = vpack.c.b16 %v654, %v653
    %v875 = vpack.c.b16 %v656, %v655
    %v876 = vpack.c.b16 %v658, %v657
    %v877 = vpack.c.b16 %v660, %v659
    %v878 = vpack.c.b16 %v662, %v661
    %v879 = vpack.c.b16 %v664, %v663
    %v880 = vpack.c.b16 %v666, %v665
    %v881 = vpack.c.b16 %v668, %v667
    %v882 = vpack.c.b16 %v670, %v669
    %v883 = vpack.c.b16 %v672, %v671
    %v884 = vpack.c.b16 %v674, %v673
    %v885 = vpack.c.b16 %v676, %v675
    %v886 = vpack.c.b16 %v678, %v677
    %v887 = vpack.c.b16 %v680, %v679
    %v888 = vpack.c.b16 %v682, %v681
    %v889 = vpack.c.b16 %v684, %v683
    %v890 = vpack.c.b16 %v686, %v685
    %v891 = vpack.c.b16 %v688, %v687
    %v892 = vpack.c.b16 %v690, %v689
    %v893 = vpack.c.b16 %v692, %v691
    %v894 = vpack.c.b16 %v694, %v693
    %v895 = vpack.c.b16 %v696, %v695
    %v896 = vpack.c.b16 %v698, %v697
    %v897 = vpack.c.b16 %v700, %v699
    %v898 = vpack.c.b16 %v702, %v701
    %v899 = vpack.c.b16 %v704, %v703
    %v900 = vpack.c.b16 %v706, %v705
    %v901 = vpack.c.b16 %v708, %v707
    %v902 = vpack.c.b16 %v710, %v709
    %v903 = vpack.c.b16 %v712, %v711
    %v904 = vpack.c.b16 %v714, %v713
    %v905 = vpack.c.b16 %v716, %v715
    %v906 = vpack.c.b16 %v718, %v717
    %v907 = vpack.c.b16 %v720, %v719
    %v908 = vpack.c.b16 %v722, %v721
    %v909 = vpack.c.b16 %v724, %v723
    %v910 = vpack.c.b16 %v726, %v725
    %v911 = vpack.c.b16 %v728, %v727
    %v912 = vpack.c.b16 %v730, %v729
    %v913 = vpack.c.b16 %v732, %v731
    %v914 = vpack.c.b16 %v734, %v733
    %v915 = vpack.c.b16 %v736, %v735
    %v916 = vpack.c.b16 %v738, %v737
    %v917 = vpack.c.b16 %v740, %v739
    %v918 = vpack.c.b16 %v742, %v741
    %v919 = vpack.c.b16 %v744, %v743
    %v920 = vpack.c.b16 %v746, %v745
    %v921 = vpack.c.b16 %v748, %v747
    %v922 = vpack.c.b16 %v750, %v749
    %v923 = vpack.c.b16 %v752, %v751
    %v924 = vpack.c.b16 %v754, %v753
    %v925 = vpack.c.b16 %v756, %v755
    %v926 = vpack.c.b16 %v758, %v757
    %v927 = vpack.c.b16 %v760, %v759
    %v928 = vpack.c.b16 %v762, %v761
    %v929 = vpack.c.b16 %v764, %v763
    %v930 = vpack.c.b16 %v766, %v765
    %v931 = vpack.c.b16 %v768, %v767
    %v932 = vpack.c.b16 %v770, %v769
    %v933 = vpack.c.b16 %v772, %v771
    %v934 = vpack.c.b16 %v774, %v773
    %v935 = vpack.c.b16 %v776, %v775
    %v936 = vpack.c.b16 %v778, %v777
    %v937 = vpack.c.b16 %v780, %v779
    %v938 = vpack.c.b16 %v782, %v781
    %v939 = vpack.c.b16 %v784, %v783
    %v940 = vpack.c.b16 %v786, %v785
    %v941 = vpack.c.b16 %v788, %v787
    %v942 = vpack.c.b16 %v790, %v789
    %v943 = vpack.c.b16 %v792, %v791
    %v944 = vpack.c.b16 %v794, %v793
    %v945 = vpack.c.b16 %v796, %v795
    %v946 = vpack.c.b16 %v798, %v797
    %v947 = vpack.c.b16 %v800, %v799
    %v948 = vpack.c.b16 %v802, %v801
    %v949 = vpack.c.b16 %v804, %v803
    %v950 = vpack.c.b16 %v806, %v805
    %v951 = vpack.c.b16 %v808, %v807
    %v952 = vpack.c.b16 %v810, %v809
    %v953 = vpack.c.b16 %v812, %v811
    %v954 = vpack.c.b16 %v814, %v813
    %v955 = vpack.c.b16 %v816, %v815
    %v956 = vpack.c.b16 %v818, %v817
    %v957 = vpack.c.b16 %v820, %v819
    %v958 = vpack.c.b16 %v822, %v821
    %v959 = vpack.c.b16 %v824, %v823
    %v960 = vpack.c.b16 %v826, %v825
    %v961 = vpack.c.b16 %v828, %v827
    %v962 = vpack.c.b16 %v830, %v829
    %v963 = vpack.c.b16 %v832, %v831
    %v964 = vpack.c.b16 %v834, %v833
    %v965 = vpack.c.b16 %v836, %v835
    %v966 = vpack.c.b16 %v838, %v837
    %1095 = vmatprep.subr.bf16.mxu0 0
    %1096 = vmatpush1.bf16.msra.mxu0 %v839
    %1097 = vmatprep.subr.bf16.mxu0 0
    %1098 = vmatpush1.bf16.msra.mxu0 %v840
    %1099 = vmatprep.subr.bf16.mxu0 0
    %1100 = vmatpush1.bf16.msra.mxu0 %v841
    %1101 = vmatprep.subr.bf16.mxu0 0
    %1102 = vmatpush1.bf16.msra.mxu0 %v842
    %1103 = vmatprep.subr.bf16.mxu0 0
    %1104 = vmatpush1.bf16.msra.mxu0 %v843
    %1105 = vmatprep.subr.bf16.mxu0 0
    %1106 = vmatpush1.bf16.msra.mxu0 %v844
    %1107 = vmatprep.subr.bf16.mxu0 0
    %1108 = vmatpush1.bf16.msra.mxu0 %v845
    %1109 = vmatprep.subr.bf16.mxu0 0
    %1110 = vmatpush1.bf16.msra.mxu0 %v846
    %1111 = vmatprep.subr.bf16.mxu0 0
    %1112 = vmatpush1.bf16.msra.mxu0 %v847
    %1113 = vmatprep.subr.bf16.mxu0 0
    %1114 = vmatpush1.bf16.msra.mxu0 %v848
    %1115 = vmatprep.subr.bf16.mxu0 0
    %1116 = vmatpush1.bf16.msra.mxu0 %v849
    %1117 = vmatprep.subr.bf16.mxu0 0
    %1118 = vmatpush1.bf16.msra.mxu0 %v850
    %1119 = vmatprep.subr.bf16.mxu0 0
    %1120 = vmatpush1.bf16.msra.mxu0 %v851
    %1121 = vmatprep.subr.bf16.mxu0 0
    %1122 = vmatpush1.bf16.msra.mxu0 %v852
    %1123 = vmatprep.subr.bf16.mxu0 0
    %1124 = vmatpush1.bf16.msra.mxu0 %v853
    %1125 = vmatprep.subr.bf16.mxu0 0
    %1126 = vmatpush1.bf16.msra.mxu0 %v854
    %1127 = vmatprep.mubr.bf16.mxu0 %v49
    %1128 = vmatmul.mubr.bf16.gmra.mrb[0].mxu0 %v48
    %v1129 = vpop.f32.mrb[0].mxu0
    %v1130 = vadd.f32 %v325, %v1129
    %v1131 = vpop.f32.mrb[0].mxu0
    %v1132 = vpop.f32.mrb[0].mxu0
    %v1133 = vadd.f32 %v325, %v1132
    %v1134 = vpop.f32.mrb[0].mxu0
    %1135 = vdwg.mxu0
    %1136 = vmatprep.subr.bf16.mxu0 0
    %1137 = vmatpush1.bf16.msra.mxu0 %v855
    %1138 = vmatprep.subr.bf16.mxu0 0
    %1139 = vmatpush1.bf16.msra.mxu0 %v856
    %1140 = vmatprep.subr.bf16.mxu0 0
    %1141 = vmatpush1.bf16.msra.mxu0 %v857
    %1142 = vmatprep.subr.bf16.mxu0 0
    %1143 = vmatpush1.bf16.msra.mxu0 %v858
    %1144 = vmatprep.subr.bf16.mxu0 0
    %1145 = vmatpush1.bf16.msra.mxu0 %v859
    %1146 = vmatprep.subr.bf16.mxu0 0
    %1147 = vmatpush1.bf16.msra.mxu0 %v860
    %1148 = vmatprep.subr.bf16.mxu0 0
    %1149 = vmatpush1.bf16.msra.mxu0 %v861
    %1150 = vmatprep.subr.bf16.mxu0 0
    %1151 = vmatpush1.bf16.msra.mxu0 %v862
    %1152 = vmatprep.subr.bf16.mxu0 0
    %1153 = vmatpush1.bf16.msra.mxu0 %v863
    %1154 = vmatprep.subr.bf16.mxu0 0
    %1155 = vmatpush1.bf16.msra.mxu0 %v864
    %1156 = vmatprep.subr.bf16.mxu0 0
    %1157 = vmatpush1.bf16.msra.mxu0 %v865
    %1158 = vmatprep.subr.bf16.mxu0 0
    %1159 = vmatpush1.bf16.msra.mxu0 %v866
    %1160 = vmatprep.subr.bf16.mxu0 0
    %1161 = vmatpush1.bf16.msra.mxu0 %v867
    %1162 = vmatprep.subr.bf16.mxu0 0
    %1163 = vmatpush1.bf16.msra.mxu0 %v868
    %1164 = vmatprep.subr.bf16.mxu0 0
    %1165 = vmatpush1.bf16.msra.mxu0 %v869
    %1166 = vmatprep.subr.bf16.mxu0 0
    %1167 = vmatpush1.bf16.msra.mxu0 %v870
    %1168 = vmatprep.mubr.bf16.mxu0 %v51
    %1169 = vmatmul.mubr.bf16.gmra.mrb[0].mxu0 %v50
    %v1170 = vpop.f32.mrb[0].mxu0
    %v1171 = vadd.f32 %v1130, %v1170
    %v1172 = vpop.f32.mrb[0].mxu0
    %v1173 = vpop.f32.mrb[0].mxu0
    %v1174 = vadd.f32 %v1133, %v1173
    %v1175 = vpop.f32.mrb[0].mxu0
    %1176 = vdwg.mxu0
    %1177 = vmatprep.subr.bf16.mxu0 0
    %1178 = vmatpush1.bf16.msra.mxu0 %v871
    %1179 = vmatprep.subr.bf16.mxu0 0
    %1180 = vmatpush1.bf16.msra.mxu0 %v872
    %1181 = vmatprep.subr.bf16.mxu0 0
    %1182 = vmatpush1.bf16.msra.mxu0 %v873
    %1183 = vmatprep.subr.bf16.mxu0 0
    %1184 = vmatpush1.bf16.msra.mxu0 %v874
    %1185 = vmatprep.subr.bf16.mxu0 0
    %1186 = vmatpush1.bf16.msra.mxu0 %v875
    %1187 = vmatprep.subr.bf16.mxu0 0
    %1188 = vmatpush1.bf16.msra.mxu0 %v876
    %1189 = vmatprep.subr.bf16.mxu0 0
    %1190 = vmatpush1.bf16.msra.mxu0 %v877
    %1191 = vmatprep.subr.bf16.mxu0 0
    %1192 = vmatpush1.bf16.msra.mxu0 %v878
    %1193 = vmatprep.subr.bf16.mxu0 0
    %1194 = vmatpush1.bf16.msra.mxu0 %v879
    %1195 = vmatprep.subr.bf16.mxu0 0
    %1196 = vmatpush1.bf16.msra.mxu0 %v880
    %1197 = vmatprep.subr.bf16.mxu0 0
    %1198 = vmatpush1.bf16.msra.mxu0 %v881
    %1199 = vmatprep.subr.bf16.mxu0 0
    %1200 = vmatpush1.bf16.msra.mxu0 %v882
    %1201 = vmatprep.subr.bf16.mxu0 0
    %1202 = vmatpush1.bf16.msra.mxu0 %v883
    %1203 = vmatprep.subr.bf16.mxu0 0
    %1204 = vmatpush1.bf16.msra.mxu0 %v884
    %1205 = vmatprep.subr.bf16.mxu0 0
    %1206 = vmatpush1.bf16.msra.mxu0 %v885
    %1207 = vmatprep.subr.bf16.mxu0 0
    %1208 = vmatpush1.bf16.msra.mxu0 %v886
    %1209 = vmatprep.mubr.bf16.mxu0 %v53
    %1210 = vmatmul.mubr.bf16.gmra.mrb[0].mxu0 %v52
    %v1211 = vpop.f32.mrb[0].mxu0
    %v1212 = vadd.f32 %v1171, %v1211
    %v1213 = vpop.f32.mrb[0].mxu0
    %v1214 = vpop.f32.mrb[0].mxu0
    %v1215 = vadd.f32 %v1174, %v1214
    %v1216 = vpop.f32.mrb[0].mxu0
    %1217 = vdwg.mxu0
    %1218 = vmatprep.subr.bf16.mxu0 0
    %1219 = vmatpush1.bf16.msra.mxu0 %v887
    %1220 = vmatprep.subr.bf16.mxu0 0
    %1221 = vmatpush1.bf16.msra.mxu0 %v888
    %1222 = vmatprep.subr.bf16.mxu0 0
    %1223 = vmatpush1.bf16.msra.mxu0 %v889
    %1224 = vmatprep.subr.bf16.mxu0 0
    %1225 = vmatpush1.bf16.msra.mxu0 %v890
    %1226 = vmatprep.subr.bf16.mxu0 0
    %1227 = vmatpush1.bf16.msra.mxu0 %v891
    %1228 = vmatprep.subr.bf16.mxu0 0
    %1229 = vmatpush1.bf16.msra.mxu0 %v892
    %1230 = vmatprep.subr.bf16.mxu0 0
    %1231 = vmatpush1.bf16.msra.mxu0 %v893
    %1232 = vmatprep.subr.bf16.mxu0 0
    %1233 = vmatpush1.bf16.msra.mxu0 %v894
    %1234 = vmatprep.subr.bf16.mxu0 0
    %1235 = vmatpush1.bf16.msra.mxu0 %v895
    %1236 = vmatprep.subr.bf16.mxu0 0
    %1237 = vmatpush1.bf16.msra.mxu0 %v896
    %1238 = vmatprep.subr.bf16.mxu0 0
    %1239 = vmatpush1.bf16.msra.mxu0 %v897
    %1240 = vmatprep.subr.bf16.mxu0 0
    %1241 = vmatpush1.bf16.msra.mxu0 %v898
    %1242 = vmatprep.subr.bf16.mxu0 0
    %1243 = vmatpush1.bf16.msra.mxu0 %v899
    %1244 = vmatprep.subr.bf16.mxu0 0
    %1245 = vmatpush1.bf16.msra.mxu0 %v900
    %1246 = vmatprep.subr.bf16.mxu0 0
    %1247 = vmatpush1.bf16.msra.mxu0 %v901
    %1248 = vmatprep.subr.bf16.mxu0 0
    %1249 = vmatpush1.bf16.msra.mxu0 %v902
    %1250 = vmatprep.mubr.bf16.mxu0 %v55
    %1251 = vmatmul.mubr.bf16.gmra.mrb[0].mxu0 %v54
    %v1252 = vpop.f32.mrb[0].mxu0
    %v1253 = vadd.f32 %v1212, %v1252
    %v1254 = vpop.f32.mrb[0].mxu0
    %v1255 = vpop.f32.mrb[0].mxu0
    %v1256 = vadd.f32 %v1215, %v1255
    %v1257 = vpop.f32.mrb[0].mxu0
    %1258 = vdwg.mxu0
    %1259 = vmatprep.subr.bf16.mxu0 0
    %1260 = vmatpush1.bf16.msra.mxu0 %v903
    %1261 = vmatprep.subr.bf16.mxu0 0
    %1262 = vmatpush1.bf16.msra.mxu0 %v904
    %1263 = vmatprep.subr.bf16.mxu0 0
    %1264 = vmatpush1.bf16.msra.mxu0 %v905
    %1265 = vmatprep.subr.bf16.mxu0 0
    %1266 = vmatpush1.bf16.msra.mxu0 %v906
    %1267 = vmatprep.subr.bf16.mxu0 0
    %1268 = vmatpush1.bf16.msra.mxu0 %v907
    %1269 = vmatprep.subr.bf16.mxu0 0
    %1270 = vmatpush1.bf16.msra.mxu0 %v908
    %1271 = vmatprep.subr.bf16.mxu0 0
    %1272 = vmatpush1.bf16.msra.mxu0 %v909
    %1273 = vmatprep.subr.bf16.mxu0 0
    %1274 = vmatpush1.bf16.msra.mxu0 %v910
    %1275 = vmatprep.subr.bf16.mxu0 0
    %1276 = vmatpush1.bf16.msra.mxu0 %v911
    %1277 = vmatprep.subr.bf16.mxu0 0
    %1278 = vmatpush1.bf16.msra.mxu0 %v912
    %1279 = vmatprep.subr.bf16.mxu0 0
    %1280 = vmatpush1.bf16.msra.mxu0 %v913
    %1281 = vmatprep.subr.bf16.mxu0 0
    %1282 = vmatpush1.bf16.msra.mxu0 %v914
    %1283 = vmatprep.subr.bf16.mxu0 0
    %1284 = vmatpush1.bf16.msra.mxu0 %v915
    %1285 = vmatprep.subr.bf16.mxu0 0
    %1286 = vmatpush1.bf16.msra.mxu0 %v916
    %1287 = vmatprep.subr.bf16.mxu0 0
    %1288 = vmatpush1.bf16.msra.mxu0 %v917
    %1289 = vmatprep.subr.bf16.mxu0 0
    %1290 = vmatpush1.bf16.msra.mxu0 %v918
    %1291 = vmatprep.mubr.bf16.mxu0 %v57
    %1292 = vmatmul.mubr.bf16.gmra.mrb[0].mxu0 %v56
    %v1293 = vpop.f32.mrb[0].mxu0
    %v1294 = vadd.f32 %v1253, %v1293
    %v1295 = vpop.f32.mrb[0].mxu0
    %v1296 = vpop.f32.mrb[0].mxu0
    %v1297 = vadd.f32 %v1256, %v1296
    %v1298 = vpop.f32.mrb[0].mxu0
    %1299 = vdwg.mxu0
    %1300 = vmatprep.subr.bf16.mxu0 0
    %1301 = vmatpush1.bf16.msra.mxu0 %v919
    %1302 = vmatprep.subr.bf16.mxu0 0
    %1303 = vmatpush1.bf16.msra.mxu0 %v920
    %1304 = vmatprep.subr.bf16.mxu0 0
    %1305 = vmatpush1.bf16.msra.mxu0 %v921
    %1306 = vmatprep.subr.bf16.mxu0 0
    %1307 = vmatpush1.bf16.msra.mxu0 %v922
    %1308 = vmatprep.subr.bf16.mxu0 0
    %1309 = vmatpush1.bf16.msra.mxu0 %v923
    %1310 = vmatprep.subr.bf16.mxu0 0
    %1311 = vmatpush1.bf16.msra.mxu0 %v924
    %1312 = vmatprep.subr.bf16.mxu0 0
    %1313 = vmatpush1.bf16.msra.mxu0 %v925
    %1314 = vmatprep.subr.bf16.mxu0 0
    %1315 = vmatpush1.bf16.msra.mxu0 %v926
    %1316 = vmatprep.subr.bf16.mxu0 0
    %1317 = vmatpush1.bf16.msra.mxu0 %v927
    %1318 = vmatprep.subr.bf16.mxu0 0
    %1319 = vmatpush1.bf16.msra.mxu0 %v928
    %1320 = vmatprep.subr.bf16.mxu0 0
    %1321 = vmatpush1.bf16.msra.mxu0 %v929
    %1322 = vmatprep.subr.bf16.mxu0 0
    %1323 = vmatpush1.bf16.msra.mxu0 %v930
    %1324 = vmatprep.subr.bf16.mxu0 0
    %1325 = vmatpush1.bf16.msra.mxu0 %v931
    %1326 = vmatprep.subr.bf16.mxu0 0
    %1327 = vmatpush1.bf16.msra.mxu0 %v932
    %1328 = vmatprep.subr.bf16.mxu0 0
    %1329 = vmatpush1.bf16.msra.mxu0 %v933
    %1330 = vmatprep.subr.bf16.mxu0 0
    %1331 = vmatpush1.bf16.msra.mxu0 %v934
    %1332 = vmatprep.mubr.bf16.mxu0 %v59
    %1333 = vmatmul.mubr.bf16.gmra.mrb[0].mxu0 %v58
    %v1334 = vpop.f32.mrb[0].mxu0
    %v1335 = vadd.f32 %v1294, %v1334
    %v1336 = vpop.f32.mrb[0].mxu0
    %v1337 = vpop.f32.mrb[0].mxu0
    %v1338 = vadd.f32 %v1297, %v1337
    %v1339 = vpop.f32.mrb[0].mxu0
    %1340 = vdwg.mxu0
    %1341 = vmatprep.subr.bf16.mxu0 0
    %1342 = vmatpush1.bf16.msra.mxu0 %v935
    %1343 = vmatprep.subr.bf16.mxu0 0
    %1344 = vmatpush1.bf16.msra.mxu0 %v936
    %1345 = vmatprep.subr.bf16.mxu0 0
    %1346 = vmatpush1.bf16.msra.mxu0 %v937
    %1347 = vmatprep.subr.bf16.mxu0 0
    %1348 = vmatpush1.bf16.msra.mxu0 %v938
    %1349 = vmatprep.subr.bf16.mxu0 0
    %1350 = vmatpush1.bf16.msra.mxu0 %v939
    %1351 = vmatprep.subr.bf16.mxu0 0
    %1352 = vmatpush1.bf16.msra.mxu0 %v940
    %1353 = vmatprep.subr.bf16.mxu0 0
    %1354 = vmatpush1.bf16.msra.mxu0 %v941
    %1355 = vmatprep.subr.bf16.mxu0 0
    %1356 = vmatpush1.bf16.msra.mxu0 %v942
    %1357 = vmatprep.subr.bf16.mxu0 0
    %1358 = vmatpush1.bf16.msra.mxu0 %v943
    %1359 = vmatprep.subr.bf16.mxu0 0
    %1360 = vmatpush1.bf16.msra.mxu0 %v944
    %1361 = vmatprep.subr.bf16.mxu0 0
    %1362 = vmatpush1.bf16.msra.mxu0 %v945
    %1363 = vmatprep.subr.bf16.mxu0 0
    %1364 = vmatpush1.bf16.msra.mxu0 %v946
    %1365 = vmatprep.subr.bf16.mxu0 0
    %1366 = vmatpush1.bf16.msra.mxu0 %v947
    %1367 = vmatprep.subr.bf16.mxu0 0
    %1368 = vmatpush1.bf16.msra.mxu0 %v948
    %1369 = vmatprep.subr.bf16.mxu0 0
    %1370 = vmatpush1.bf16.msra.mxu0 %v949
    %1371 = vmatprep.subr.bf16.mxu0 0
    %1372 = vmatpush1.bf16.msra.mxu0 %v950
    %1373 = vmatprep.mubr.bf16.mxu0 %v61
    %1374 = vmatmul.mubr.bf16.gmra.mrb[0].mxu0 %v60
    %v1375 = vpop.f32.mrb[0].mxu0
    %v1376 = vadd.f32 %v1335, %v1375
    %v1377 = vpop.f32.mrb[0].mxu0
    %v1378 = vpop.f32.mrb[0].mxu0
    %v1379 = vadd.f32 %v1338, %v1378
    %v1380 = vpop.f32.mrb[0].mxu0
    %1381 = vdwg.mxu0
    %1382 = vmatprep.subr.bf16.mxu0 0
    %1383 = vmatpush1.bf16.msra.mxu0 %v951
    %1384 = vmatprep.subr.bf16.mxu0 0
    %1385 = vmatpush1.bf16.msra.mxu0 %v952
    %1386 = vmatprep.subr.bf16.mxu0 0
    %1387 = vmatpush1.bf16.msra.mxu0 %v953
    %1388 = vmatprep.subr.bf16.mxu0 0
    %1389 = vmatpush1.bf16.msra.mxu0 %v954
    %1390 = vmatprep.subr.bf16.mxu0 0
    %1391 = vmatpush1.bf16.msra.mxu0 %v955
    %1392 = vmatprep.subr.bf16.mxu0 0
    %1393 = vmatpush1.bf16.msra.mxu0 %v956
    %1394 = vmatprep.subr.bf16.mxu0 0
    %1395 = vmatpush1.bf16.msra.mxu0 %v957
    %1396 = vmatprep.subr.bf16.mxu0 0
    %1397 = vmatpush1.bf16.msra.mxu0 %v958
    %1398 = vmatprep.subr.bf16.mxu0 0
    %1399 = vmatpush1.bf16.msra.mxu0 %v959
    %1400 = vmatprep.subr.bf16.mxu0 0
    %1401 = vmatpush1.bf16.msra.mxu0 %v960
    %1402 = vmatprep.subr.bf16.mxu0 0
    %1403 = vmatpush1.bf16.msra.mxu0 %v961
    %1404 = vmatprep.subr.bf16.mxu0 0
    %1405 = vmatpush1.bf16.msra.mxu0 %v962
    %1406 = vmatprep.subr.bf16.mxu0 0
    %1407 = vmatpush1.bf16.msra.mxu0 %v963
    %1408 = vmatprep.subr.bf16.mxu0 0
    %1409 = vmatpush1.bf16.msra.mxu0 %v964
    %1410 = vmatprep.subr.bf16.mxu0 0
    %1411 = vmatpush1.bf16.msra.mxu0 %v965
    %1412 = vmatprep.subr.bf16.mxu0 0
    %1413 = vmatpush1.bf16.msra.mxu0 %v966
    %1414 = vmatprep.mubr.bf16.mxu0 %v63
    %1415 = vmatmul.mubr.bf16.gmra.mrb[0].mxu0 %v62
    %v1416 = vpop.f32.mrb[0].mxu0
    %v1417 = vadd.f32 %v1376, %v1416
    %v1418 = vpop.f32.mrb[0].mxu0
    %v1419 = vpop.f32.mrb[0].mxu0
    %v1420 = vadd.f32 %v1379, %v1419
    %v1421 = vpop.f32.mrb[0].mxu0
    %1422 = vdwg.mxu0
    %vm1423 = vcmask 187392
    %1424 = vst.msk [vmem:[#allocation2] sm:$0xff] %vm1423, %v1417
    %1425 = vst.msk [vmem:[#allocation2 + $0x8] sm:$0xff] %vm1423, %v1420
    // Predicated region
    $region14: #{deepheme_transformer_forward.1} parent=1 // pred_check
      _
    $region15: #{deepheme_transformer_forward.1} parent=1 // pred_check_branch
      %1427 = sbr.rel (0) target = $region17
    $region16: #{deepheme_transformer_forward.1} parent=1 // pred_region
      %s1429 = ssub.s32 256, 256
      %1430 = vsyncadd [#allocation3], %s1429
      %s1431 = sshll.u32 [#allocation2], 4
      %s1432 = int_to_ptr.vmem [resolvable:$true] %s1431
      %1437 = dma.vmem_to_hbm [thread:$0]  %s1432, 256, %s3, [#allocation3], 128, 128, 8
    $region17: #{deepheme_transformer_forward.1} parent=1 // pred_fallthru
      _
    // Predicated region
    $region18: #{deepheme_transformer_forward.1} parent=1 // pred_check
      _
    $region19: #{deepheme_transformer_forward.1} parent=1 // pred_check_branch
      %1439 = sbr.rel (0) target = $region21
    $region20: #{deepheme_transformer_forward.1} parent=1 // pred_region
      %1440 = dma.done [#allocation3], 256
    $region21: #{deepheme_transformer_forward.1} parent=1 // pred_fallthru
      _
    %1441 = vsyncpa [#allocation3], 1

</llo_original>
